<compile_context>
chip_gen: v7x
topology: tpu7x:2x2x1
jax: 0.10.0
libtpu: 0.0.40
codegen_flags: <defaults>
</compile_context>

<pallas_src>
import functools

import jax
import jax.numpy as jnp
from jax.experimental import pallas as pl
from jax.experimental.pallas import tpu as pltpu


def _combiner2_kernel(h_ref, g_ref,
                      w1_ref, b1_ref,
                      wls_ref, bls_ref,
                      out_ref, *, z_dim):
    h = h_ref[...]
    g = g_ref[...]

    # lin_h_to_g + tanh, then combine with gtm1 (f32 math for v5e VPU/EUP).
    pre_g = jnp.dot(h, w1_ref[...], preferred_element_type=jnp.float32) + b1_ref[...]
    h_combined = 0.5 * (jnp.tanh(pre_g) + g.astype(jnp.float32))

    # Fused (and lane-padded) loc|scale projection: one matmul per tile.
    fused = jnp.dot(h_combined.astype(wls_ref.dtype), wls_ref[...],
                    preferred_element_type=jnp.float32) + bls_ref[...]

    # Stable softplus on all lanes (EUP slot is cheap filler), then select:
    # lanes [0, z_dim) keep the raw loc values, lanes [z_dim, ...) get
    # softplus.  Keeps the store a single lane-dense write.
    sp = jnp.maximum(fused, 0.0) + jnp.log1p(jnp.exp(-jnp.abs(fused)))
    lane = jax.lax.broadcasted_iota(jnp.int32, fused.shape, dimension=1)
    out = jnp.where(lane >= z_dim, sp, fused)

    out_ref[...] = out.astype(out_ref.dtype)


def _round_up(x, m):
    return ((x + m - 1) // m) * m


def combiner_2_pallas(htm1, gtm1, params, *, out_dtype=jnp.float32):
    """htm1: (B, h_dim), gtm1: (B, g_dim) -> (loc: (B, z_dim), scale: (B, z_dim))."""
    B, h_dim = htm1.shape
    _, g_dim = gtm1.shape
    z_dim = params["w_loc"].shape[1]

    # Fuse loc/scale weights into one (g_dim, 2*z_dim) projection and pad the
    # lane (output-feature) axis to a multiple of 128 for lane-dense stores.
    w_ls = jnp.concatenate([params["w_loc"], params["w_scale"]], axis=1)
    b_ls = jnp.concatenate([params["b_loc"], params["b_scale"]], axis=1)
    ls_width = 2 * z_dim
    ls_pad = _round_up(ls_width, 128)
    if ls_pad != ls_width:
        w_ls = jnp.pad(w_ls, ((0, 0), (0, ls_pad - ls_width)))
        b_ls = jnp.pad(b_ls, ((0, 0), (0, ls_pad - ls_width)))

    # Batch tiling: TB up to 256 rows (fills the MXU M dimension, well inside
    # VMEM at these feature widths).
    if B >= 256:
        tb = 256
    else:
        tb = _round_up(B, 8)
    bp = _round_up(B, tb)

    if bp != B:
        pad = bp - B
        htm1_p = jnp.pad(htm1, ((0, pad), (0, 0)))
        gtm1_p = jnp.pad(gtm1, ((0, pad), (0, 0)))
    else:
        htm1_p, gtm1_p = htm1, gtm1

    kernel = functools.partial(_combiner2_kernel, z_dim=z_dim)

    fused_out = pl.pallas_call(
        kernel,
        out_shape=jax.ShapeDtypeStruct((bp, ls_pad), out_dtype),
        grid=(pl.cdiv(bp, tb),),
        in_specs=[
            pl.BlockSpec((tb, h_dim), lambda i: (i, 0)),        # htm1 tile
            pl.BlockSpec((tb, g_dim), lambda i: (i, 0)),        # gtm1 tile
            pl.BlockSpec((h_dim, g_dim), lambda i: (0, 0)),     # w1 (resident)
            pl.BlockSpec((1, g_dim), lambda i: (0, 0)),         # b1 (resident)
            pl.BlockSpec((g_dim, ls_pad), lambda i: (0, 0)),    # w_loc|w_scale (padded)
            pl.BlockSpec((1, ls_pad), lambda i: (0, 0)),        # b_loc|b_scale (padded)
        ],
        out_specs=pl.BlockSpec((tb, ls_pad), lambda i: (i, 0)),
        compiler_params=pltpu.CompilerParams(
            dimension_semantics=("parallel",)),
    )(htm1_p, gtm1_p, params["w1"], params["b1"], w_ls, b_ls)

    loc = fused_out[:B, :z_dim]
    scale = fused_out[:B, z_dim:2 * z_dim]
    return loc, scale


def init_params(key, z_dim, h_dim, g_dim):
    """Deterministic init mirroring nn.Linear default (uniform(-1/sqrt(fan_in), ...))."""
    ks = jax.random.split(key, 6)

    def lin(kw, kb, fan_in, fan_out):
        bound = 1.0 / jnp.sqrt(fan_in)
        w = jax.random.uniform(kw, (fan_in, fan_out), jnp.float32, -bound, bound)
        b = jax.random.uniform(kb, (1, fan_out), jnp.float32, -bound, bound)
        return w, b

    w1, b1 = lin(ks[0], ks[1], h_dim, g_dim)
    w_loc, b_loc = lin(ks[2], ks[3], g_dim, z_dim)
    w_scale, b_scale = lin(ks[4], ks[5], g_dim, z_dim)
    return dict(w1=w1, b1=b1, w_loc=w_loc, b_loc=b_loc,
                w_scale=w_scale, b_scale=b_scale)


def combiner_2_ref(htm1, gtm1, p):
    h_combined = 0.5 * (jnp.tanh(htm1 @ p["w1"] + p["b1"]) + gtm1)
    loc = h_combined @ p["w_loc"] + p["b_loc"]
    scale = jax.nn.softplus(h_combined @ p["w_scale"] + p["b_scale"])
    return loc, scale


if __name__ == "__main__":
    z_dim, h_dim, g_dim = 16, 32, 32
    key = jax.random.PRNGKey(0)
    k_h, k_g, k_p, k_h2, k_g2 = jax.random.split(key, 5)
    params = init_params(k_p, z_dim, h_dim, g_dim)

    # Small shape from the module spec (single grid step).
    B = 8
    htm1 = jax.random.normal(k_h, (B, h_dim), jnp.float32)
    gtm1 = jax.random.normal(k_g, (B, g_dim), jnp.float32)
    loc, scale = combiner_2_pallas(htm1, gtm1, params)
    jax.block_until_ready((loc, scale))
    loc_r, scale_r = combiner_2_ref(htm1, gtm1, params)
    assert jnp.allclose(loc, loc_r, atol=1e-5, rtol=1e-5)
    assert jnp.allclose(scale, scale_r, atol=1e-5, rtol=1e-5)

    # Larger batch: exercises batch tiling (grid > 1) and padding path.
    B2 = 300
    htm1_2 = jax.random.normal(k_h2, (B2, h_dim), jnp.float32)
    gtm1_2 = jax.random.normal(k_g2, (B2, g_dim), jnp.float32)
    loc2, scale2 = combiner_2_pallas(htm1_2, gtm1_2, params)
    jax.block_until_ready((loc2, scale2))
    loc2_r, scale2_r = combiner_2_ref(htm1_2, gtm1_2, params)
    assert jnp.allclose(loc2, loc2_r, atol=1e-5, rtol=1e-5)
    assert jnp.allclose(scale2, scale2_r, atol=1e-5, rtol=1e-5)

    print("KERNEL_OK")
</pallas_src>

<mosaic_0001>
module attributes {stable_mosaic.version = 11 : i64} {
  func.func @_combiner2_kernel(%arg0: i32, %arg1: memref<8x32xf32, #tpu.memory_space<vmem>>, %arg2: memref<8x32xf32, #tpu.memory_space<vmem>>, %arg3: memref<32x32xf32, #tpu.memory_space<vmem>>, %arg4: memref<1x32xf32, #tpu.memory_space<vmem>>, %arg5: memref<32x128xf32, #tpu.memory_space<vmem>>, %arg6: memref<1x128xf32, #tpu.memory_space<vmem>>, %arg7: memref<8x128xf32, #tpu.memory_space<vmem>>) attributes {dimension_semantics = [#tpu.dimension_semantics<parallel>], iteration_bounds = array<i64: 1>, scalar_prefetch = 0 : i64, scratch_operands = 0 : i64, tpu.core_type = #tpu.core_type<tc>, window_params = [{transform_indices = @transform_0, window_bounds = array<i64: 8, 32>}, {transform_indices = @transform_1, window_bounds = array<i64: 8, 32>}, {pipeline_mode = #tpu.pipeline_mode<synchronous>, transform_indices = @transform_2, window_bounds = array<i64: 32, 32>}, {pipeline_mode = #tpu.pipeline_mode<synchronous>, transform_indices = @transform_3, window_bounds = array<i64: 1, 32>}, {pipeline_mode = #tpu.pipeline_mode<synchronous>, transform_indices = @transform_4, window_bounds = array<i64: 32, 128>}, {pipeline_mode = #tpu.pipeline_mode<synchronous>, transform_indices = @transform_5, window_bounds = array<i64: 1, 128>}, {transform_indices = @transform_6, window_bounds = array<i64: 8, 128>}]} {
    %c0 = arith.constant 0 : index
    %c0_0 = arith.constant 0 : index
    %0 = vector.load %arg1[%c0, %c0_0] : memref<8x32xf32, #tpu.memory_space<vmem>>, vector<8x32xf32>
    %c0_1 = arith.constant 0 : index
    %c0_2 = arith.constant 0 : index
    %1 = vector.load %arg2[%c0_1, %c0_2] : memref<8x32xf32, #tpu.memory_space<vmem>>, vector<8x32xf32>
    %c0_3 = arith.constant 0 : index
    %c0_4 = arith.constant 0 : index
    %2 = vector.load %arg3[%c0_3, %c0_4] : memref<32x32xf32, #tpu.memory_space<vmem>>, vector<32x32xf32>
    %cst = arith.constant dense<0.000000e+00> : vector<8x32xf32>
    %3 = tpu.matmul %0, %2, %cst {dimension_numbers = #tpu.dot_dimension_numbers<[1], [0], [0], [1], [0, 0, 1, 1], [], []>} : vector<8x32xf32>, vector<32x32xf32>, vector<8x32xf32> -> vector<8x32xf32>
    %c0_5 = arith.constant 0 : index
    %c0_6 = arith.constant 0 : index
    %4 = vector.load %arg4[%c0_5, %c0_6] : memref<1x32xf32, #tpu.memory_space<vmem>>, vector<1x32xf32>
    %5 = vector.broadcast %4 : vector<1x32xf32> to vector<8x32xf32>
    %6 = arith.addf %3, %5 : vector<8x32xf32>
    %7 = math.tanh %6 : vector<8x32xf32>
    %8 = arith.addf %7, %1 : vector<8x32xf32>
    %cst_7 = arith.constant 5.000000e-01 : f32
    %9 = vector.broadcast %cst_7 : f32 to vector<8x32xf32>
    %10 = arith.mulf %9, %8 : vector<8x32xf32>
    %c0_8 = arith.constant 0 : index
    %c0_9 = arith.constant 0 : index
    %11 = vector.load %arg5[%c0_8, %c0_9] : memref<32x128xf32, #tpu.memory_space<vmem>>, vector<32x128xf32>
    %cst_10 = arith.constant dense<0.000000e+00> : vector<8x128xf32>
    %12 = tpu.matmul %10, %11, %cst_10 {dimension_numbers = #tpu.dot_dimension_numbers<[1], [0], [0], [1], [0, 0, 1, 1], [], []>} : vector<8x32xf32>, vector<32x128xf32>, vector<8x128xf32> -> vector<8x128xf32>
    %c0_11 = arith.constant 0 : index
    %c0_12 = arith.constant 0 : index
    %13 = vector.load %arg6[%c0_11, %c0_12] : memref<1x128xf32, #tpu.memory_space<vmem>>, vector<1x128xf32>
    %14 = vector.broadcast %13 : vector<1x128xf32> to vector<8x128xf32>
    %15 = arith.addf %12, %14 : vector<8x128xf32>
    %cst_13 = arith.constant 0.000000e+00 : f32
    %16 = vector.broadcast %cst_13 : f32 to vector<8x128xf32>
    %17 = arith.maximumf %15, %16 : vector<8x128xf32>
    %18 = math.absf %15 : vector<8x128xf32>
    %cst_14 = arith.constant 0.000000e+00 : f32
    %19 = vector.broadcast %cst_14 : f32 to vector<8x128xf32>
    %20 = arith.subf %19, %18 : vector<8x128xf32>
    %21 = math.exp %20 : vector<8x128xf32>
    %22 = math.log1p %21 : vector<8x128xf32>
    %23 = arith.addf %17, %22 : vector<8x128xf32>
    %24 = tpu.iota {dimensions = array<i32: 1>} : vector<8x128xi32>
    %c16_i32 = arith.constant 16 : i32
    %25 = vector.broadcast %c16_i32 : i32 to vector<8x128xi32>
    %26 = arith.cmpi sge, %24, %25 : vector<8x128xi32>
    %27 = arith.select %26, %23, %15 : vector<8x128xi1>, vector<8x128xf32>
    %c0_15 = arith.constant 0 : index
    %c0_16 = arith.constant 0 : index
    %28 = vector.load %arg7[%c0_15, %c0_16] : memref<8x128xf32, #tpu.memory_space<vmem>>, vector<8x128xf32>
    tpu.vector_store %arg7[%c0_15, %c0_16], %27 {strides = array<i32>} : memref<8x128xf32, #tpu.memory_space<vmem>>, vector<8x128xf32>,
    return
  }
  func.func @transform_0(%arg0: i32) -> (i32, i32) {
    %c0_i32 = arith.constant 0 : i32
    %c0_i32_0 = arith.constant 0 : i32
    return %arg0, %c0_i32 : i32, i32
  }
  func.func @transform_1(%arg0: i32) -> (i32, i32) {
    %c0_i32 = arith.constant 0 : i32
    %c0_i32_0 = arith.constant 0 : i32
    return %arg0, %c0_i32 : i32, i32
  }
  func.func @transform_2(%arg0: i32) -> (i32, i32) {
    %c0_i32 = arith.constant 0 : i32
    %c0_i32_0 = arith.constant 0 : i32
    %c0_i32_1 = arith.constant 0 : i32
    return %c0_i32, %c0_i32_0 : i32, i32
  }
  func.func @transform_3(%arg0: i32) -> (i32, i32) {
    %c0_i32 = arith.constant 0 : i32
    %c0_i32_0 = arith.constant 0 : i32
    %c0_i32_1 = arith.constant 0 : i32
    return %c0_i32, %c0_i32_0 : i32, i32
  }
  func.func @transform_4(%arg0: i32) -> (i32, i32) {
    %c0_i32 = arith.constant 0 : i32
    %c0_i32_0 = arith.constant 0 : i32
    %c0_i32_1 = arith.constant 0 : i32
    return %c0_i32, %c0_i32_0 : i32, i32
  }
  func.func @transform_5(%arg0: i32) -> (i32, i32) {
    %c0_i32 = arith.constant 0 : i32
    %c0_i32_0 = arith.constant 0 : i32
    %c0_i32_1 = arith.constant 0 : i32
    return %c0_i32, %c0_i32_0 : i32, i32
  }
  func.func @transform_6(%arg0: i32) -> (i32, i32) {
    %c0_i32 = arith.constant 0 : i32
    %c0_i32_0 = arith.constant 0 : i32
    return %arg0, %c0_i32 : i32, i32
  }
}

</mosaic_0001>

<llo_original>
// kernel: tpu_custom_call.1
$region0: #{tpu_custom_call.1}
  #allocation0 [shape = 'u32[]', space=smem, size = 0x4, offset = 0x4, fixed_abs, tag = 'smem constant byte address 0x4 - core index']
  #allocation1 [shape = 'u32[144,128]{1,0:T(1,128)}', space=vmem, size = 0x12000, scoped, tag = 'internal scratch']
  %s0 = inlined_call_operand.hbm [shape: f32[8,32], index: 0, kind: input, shape index: {}]
  %s1 = inlined_call_operand.hbm [shape: f32[8,32], index: 1, kind: input, shape index: {}]
  %s2 = inlined_call_operand.hbm [shape: f32[32,32], index: 2, kind: input, shape index: {}]
  %s3 = inlined_call_operand.vmem [shape: f32[1,32], index: 3, kind: input, shape index: {}]
  %s4 = inlined_call_operand.hbm [shape: f32[32,128], index: 4, kind: input, shape index: {}]
  %s5 = inlined_call_operand.vmem [shape: f32[1,128], index: 5, kind: input, shape index: {}]
  %s6 = inlined_call_operand.hbm [shape: f32[8,128], index: 6, kind: output, shape index: {}]
  %s7 = sld [smem:[#allocation0]]
  $region50: #{tpu_custom_call.1} parent=0
    _
  %s9 = ssub.s32 1, %s7
  %s10 = scalar_select 0, %s9, %s7
  $region1: #{tpu_custom_call.1} parent=0
    #allocation2 [shape = 'u8[4096]{0}', space=vmem, size = 0x1000, scoped, tag = 'input window, operand 0, single buffered']
    #allocation3 [shape = 's32[1]{0}', space=sflag, size = 0x4, scoped, tag = 'scoped memory for tpu_custom_call.1']
    #allocation4 [shape = 's32[1]{0}', space=sflag, size = 0x4, scoped, tag = 'scoped memory for tpu_custom_call.1']
    #allocation5 [shape = 'u8[4096]{0}', space=vmem, size = 0x1000, scoped, tag = 'input window, operand 1, single buffered']
    #allocation6 [shape = 's32[1]{0}', space=sflag, size = 0x4, scoped, tag = 'scoped memory for tpu_custom_call.1']
    #allocation7 [shape = 'u8[16384]{0}', space=vmem, size = 0x4000, scoped, tag = 'input window, operand 2, single buffered']
    #allocation8 [shape = 'u8[16384]{0}', space=vmem, size = 0x4000, scoped, tag = 'input window, operand 4, single buffered']
    #allocation9 [shape = 's32[1]{0}', space=sflag, size = 0x4, scoped, tag = 'scoped memory for tpu_custom_call.1']
    #allocation10 [shape = 'u8[4096]{0}', space=vmem, size = 0x1000, scoped, tag = 'output window, operand 0, single buffered']
    %11 = vsyncpa [#allocation3], 0
    %12 = vsyncpa [#allocation6], 0
    %13 = vsyncpa [#allocation9], 0
    %14 = vsyncpa [#allocation4], 0
    // Predicated region
    $region2: #{tpu_custom_call.1} parent=1 // pred_check
      _
    $region3: #{tpu_custom_call.1} parent=1 // pred_check_branch
      %16 = sbr.rel (0) target = $region5
    $region4: #{tpu_custom_call.1} parent=1 // pred_region
      %s18 = ssub.s32 128, 128
      %19 = vsyncadd [#allocation3], %s18
      %s21 = sshll.u32 [#allocation2], 4
      %s22 = int_to_ptr.vmem [resolvable:$true] %s21
      %24 = dma.hbm_to_vmem [thread:$0]  %s0, 128, %s22, [#allocation3]
    $region5: #{tpu_custom_call.1} parent=1 // pred_fallthru
      _
    // Predicated region
    $region6: #{tpu_custom_call.1} parent=1 // pred_check
      _
    $region7: #{tpu_custom_call.1} parent=1 // pred_check_branch
      %26 = sbr.rel (0) target = $region9
    $region8: #{tpu_custom_call.1} parent=1 // pred_region
      %s28 = ssub.s32 128, 128
      %29 = vsyncadd [#allocation6], %s28
      %s31 = sshll.u32 [#allocation5], 4
      %s32 = int_to_ptr.vmem [resolvable:$true] %s31
      %34 = dma.hbm_to_vmem [thread:$0]  %s1, 128, %s32, [#allocation6]
    $region9: #{tpu_custom_call.1} parent=1 // pred_fallthru
      _
    // Predicated region
    $region10: #{tpu_custom_call.1} parent=1 // pred_check
      _
    $region11: #{tpu_custom_call.1} parent=1 // pred_check_branch
      %36 = sbr.rel (0) target = $region13
    $region12: #{tpu_custom_call.1} parent=1 // pred_region
      %s38 = ssub.s32 512, 512
      %39 = vsyncadd [#allocation6], %s38
      %s40 = sshll.u32 [#allocation7], 4
      %s41 = int_to_ptr.vmem [resolvable:$true] %s40
      %46 = dma.hbm_to_vmem [thread:$0]  %s2, 512, %s41, [#allocation6], 128, 128, 8
    $region13: #{tpu_custom_call.1} parent=1 // pred_fallthru
      _
    // Predicated region
    $region14: #{tpu_custom_call.1} parent=1 // pred_check
      _
    $region15: #{tpu_custom_call.1} parent=1 // pred_check_branch
      %48 = sbr.rel (0) target = $region17
    $region16: #{tpu_custom_call.1} parent=1 // pred_region
      _
    $region17: #{tpu_custom_call.1} parent=1 // pred_fallthru
      _
    // Predicated region
    $region18: #{tpu_custom_call.1} parent=1 // pred_check
      _
    $region19: #{tpu_custom_call.1} parent=1 // pred_check_branch
      %50 = sbr.rel (0) target = $region21
    $region20: #{tpu_custom_call.1} parent=1 // pred_region
      %s52 = ssub.s32 512, 512
      %53 = vsyncadd [#allocation9], %s52
      %s54 = sshll.u32 [#allocation8], 4
      %s55 = int_to_ptr.vmem [resolvable:$true] %s54
      %60 = dma.hbm_to_vmem [thread:$0]  %s4, 512, %s55, [#allocation9], 128, 128, 8
    $region21: #{tpu_custom_call.1} parent=1 // pred_fallthru
      _
    // Predicated region
    $region22: #{tpu_custom_call.1} parent=1 // pred_check
      _
    $region23: #{tpu_custom_call.1} parent=1 // pred_check_branch
      %62 = sbr.rel (0) target = $region25
    $region24: #{tpu_custom_call.1} parent=1 // pred_region
      _
    $region25: #{tpu_custom_call.1} parent=1 // pred_fallthru
      _
    // Predicated region
    $region26: #{tpu_custom_call.1} parent=1 // pred_check
      _
    $region27: #{tpu_custom_call.1} parent=1 // pred_check_branch
      %64 = sbr.rel (0) target = $region29
    $region28: #{tpu_custom_call.1} parent=1 // pred_region
      %65 = dma.done [#allocation3], 128
    $region29: #{tpu_custom_call.1} parent=1 // pred_fallthru
      _
    // Predicated region
    $region30: #{tpu_custom_call.1} parent=1 // pred_check
      _
    $region31: #{tpu_custom_call.1} parent=1 // pred_check_branch
      %67 = sbr.rel (0) target = $region33
    $region32: #{tpu_custom_call.1} parent=1 // pred_region
      %68 = dma.done [#allocation6], 128
    $region33: #{tpu_custom_call.1} parent=1 // pred_fallthru
      _
    // Predicated region
    $region34: #{tpu_custom_call.1} parent=1 // pred_check
      _
    $region35: #{tpu_custom_call.1} parent=1 // pred_check_branch
      %70 = sbr.rel (0) target = $region37
    $region36: #{tpu_custom_call.1} parent=1 // pred_region
      %71 = dma.done [#allocation6], 512
    $region37: #{tpu_custom_call.1} parent=1 // pred_fallthru
      _
    // Predicated region
    $region38: #{tpu_custom_call.1} parent=1 // pred_check
      _
    $region39: #{tpu_custom_call.1} parent=1 // pred_check_branch
      %73 = sbr.rel (0) target = $region41
    $region40: #{tpu_custom_call.1} parent=1 // pred_region
      %74 = dma.done [#allocation9], 512
    $region41: #{tpu_custom_call.1} parent=1 // pred_fallthru
      _
    %v75 = vld [vmem:[#allocation2] sm:$0xff]
    %v76 = vld [vmem:[#allocation5] sm:$0xff]
    %v77 = vld [vmem:[#allocation7] sm:$0xff]
    %v78 = vld [vmem:[#allocation7 + $0x8] sm:$0xff]
    %v79 = vld [vmem:[#allocation7 + $0x10] sm:$0xff]
    %v80 = vld [vmem:[#allocation7 + $0x18] sm:$0xff]
    %v81 = vld [vmem:[%s3] sm:$0x1]
    %v83 = vlaneseq
    %v84 = vshrl.u32 %v83, 7
    %v85 = vsub.s32 0, %v84
    %v86 = vrot.slane %v81, %v85
    %vm88 = vcmask 261120
    %v90 = vsel %vm88, %v75, 0
    %92 = vmatprep.subr.mxu0 0.0
    %93 = vmatpush1.msra.mxu0 %v77
    %94 = vmatprep.subr.mxu0 0.0
    %95 = vmatpush1.msra.mxu0 %v78
    %96 = vmatprep.subr.mxu0 0.0
    %97 = vmatpush1.msra.mxu0 %v79
    %98 = vmatprep.subr.mxu0 0.0
    %99 = vmatpush1.msra.mxu0 %v80
    %100 = vmatprep.subr.mxu0 0.0
    %101 = vmatpush1.msra.mxu0 0.0
    %102 = vmatprep.subr.mxu0 0.0
    %103 = vmatpush1.msra.mxu0 0.0
    %104 = vmatprep.subr.mxu0 0.0
    %105 = vmatpush1.msra.mxu0 0.0
    %106 = vmatprep.subr.mxu0 0.0
    %107 = vmatpush1.msra.mxu0 0.0
    %108 = vmatprep.subr.mxu0 0.0
    %109 = vmatpush1.msra.mxu0 0.0
    %110 = vmatprep.subr.mxu0 0.0
    %111 = vmatpush1.msra.mxu0 0.0
    %112 = vmatprep.subr.mxu0 0.0
    %113 = vmatpush1.msra.mxu0 0.0
    %114 = vmatprep.subr.mxu0 0.0
    %115 = vmatpush1.msra.mxu0 0.0
    %116 = vmatprep.subr.mxu0 0.0
    %117 = vmatpush1.msra.mxu0 0.0
    %118 = vmatprep.subr.mxu0 0.0
    %119 = vmatpush1.msra.mxu0 0.0
    %120 = vmatprep.subr.mxu0 0.0
    %121 = vmatpush1.msra.mxu0 0.0
    %122 = vmatprep.subr.mxu0 0.0
    %123 = vmatpush1.msra.mxu0 0.0
    %124 = vmatprep.subr.mxu0 0.0
    %125 = vmatpush1.msra.mxu0 0.0
    %126 = vmatprep.subr.mxu0 0.0
    %127 = vmatpush1.msra.mxu0 0.0
    %128 = vmatprep.subr.mxu0 0.0
    %129 = vmatpush1.msra.mxu0 0.0
    %130 = vmatprep.subr.mxu0 0.0
    %131 = vmatpush1.msra.mxu0 0.0
    %132 = vmatprep.subr.mxu0 0.0
    %133 = vmatpush1.msra.mxu0 0.0
    %134 = vmatprep.subr.mxu0 0.0
    %135 = vmatpush1.msra.mxu0 0.0
    %136 = vmatprep.subr.mxu0 0.0
    %137 = vmatpush1.msra.mxu0 0.0
    %138 = vmatprep.subr.mxu0 0.0
    %139 = vmatpush1.msra.mxu0 0.0
    %140 = vmatprep.subr.mxu0 0.0
    %141 = vmatpush1.msra.mxu0 0.0
    %142 = vmatprep.subr.mxu0 0.0
    %143 = vmatpush1.msra.mxu0 0.0
    %144 = vmatprep.subr.mxu0 0.0
    %145 = vmatpush1.msra.mxu0 0.0
    %146 = vmatprep.subr.mxu0 0.0
    %147 = vmatpush1.msra.mxu0 0.0
    %148 = vmatprep.subr.mxu0 0.0
    %149 = vmatpush1.msra.mxu0 0.0
    %150 = vmatprep.subr.mxu0 0.0
    %151 = vmatpush1.msra.mxu0 0.0
    %152 = vmatprep.subr.mxu0 0.0
    %153 = vmatpush1.msra.mxu0 0.0
    %154 = vmatprep.subr.mxu0 0.0
    %155 = vmatpush1.msra.mxu0 0.0
    %156 = vmatprep.mubr.f32.mxu0 0.0
    %157 = vmatmul.mubr.f32.gmra.mrb[0].mxu0 %v90
    %v158 = vpop.f32.mrb[0].mxu0
    %v159 = vadd.f32 %v86, %v158
    %v160 = vpop.f32.mrb[0].mxu0
    %161 = vdwg.mxu0
    %v162 = vtanh.pop %v159
    %v163 = vadd.f32 %v162, %v76
    %v164 = vmul.f32 %v163, 0.5
    %v165 = vld [vmem:[#allocation8] sm:$0xff]
    %v166 = vld [vmem:[#allocation8 + $0x8] sm:$0xff]
    %v167 = vld [vmem:[#allocation8 + $0x10] sm:$0xff]
    %v168 = vld [vmem:[#allocation8 + $0x18] sm:$0xff]
    %v169 = vld [vmem:[%s5] sm:$0x1]
    %v171 = vlaneseq
    %v172 = vshrl.u32 %v171, 7
    %v173 = vsub.s32 0, %v172
    %v174 = vrot.slane %v169, %v173
    %v177 = vsel %vm88, %v164, 0
    %179 = vmatprep.subr.mxu0 0.0
    %180 = vmatpush1.msra.mxu0 %v165
    %181 = vmatprep.subr.mxu0 0.0
    %182 = vmatpush1.msra.mxu0 %v166
    %183 = vmatprep.subr.mxu0 0.0
    %184 = vmatpush1.msra.mxu0 %v167
    %185 = vmatprep.subr.mxu0 0.0
    %186 = vmatpush1.msra.mxu0 %v168
    %187 = vmatprep.subr.mxu0 0.0
    %188 = vmatpush1.msra.mxu0 0.0
    %189 = vmatprep.subr.mxu0 0.0
    %190 = vmatpush1.msra.mxu0 0.0
    %191 = vmatprep.subr.mxu0 0.0
    %192 = vmatpush1.msra.mxu0 0.0
    %193 = vmatprep.subr.mxu0 0.0
    %194 = vmatpush1.msra.mxu0 0.0
    %195 = vmatprep.subr.mxu0 0.0
    %196 = vmatpush1.msra.mxu0 0.0
    %197 = vmatprep.subr.mxu0 0.0
    %198 = vmatpush1.msra.mxu0 0.0
    %199 = vmatprep.subr.mxu0 0.0
    %200 = vmatpush1.msra.mxu0 0.0
    %201 = vmatprep.subr.mxu0 0.0
    %202 = vmatpush1.msra.mxu0 0.0
    %203 = vmatprep.subr.mxu0 0.0
    %204 = vmatpush1.msra.mxu0 0.0
    %205 = vmatprep.subr.mxu0 0.0
    %206 = vmatpush1.msra.mxu0 0.0
    %207 = vmatprep.subr.mxu0 0.0
    %208 = vmatpush1.msra.mxu0 0.0
    %209 = vmatprep.subr.mxu0 0.0
    %210 = vmatpush1.msra.mxu0 0.0
    %211 = vmatprep.subr.mxu0 0.0
    %212 = vmatpush1.msra.mxu0 0.0
    %213 = vmatprep.subr.mxu0 0.0
    %214 = vmatpush1.msra.mxu0 0.0
    %215 = vmatprep.subr.mxu0 0.0
    %216 = vmatpush1.msra.mxu0 0.0
    %217 = vmatprep.subr.mxu0 0.0
    %218 = vmatpush1.msra.mxu0 0.0
    %219 = vmatprep.subr.mxu0 0.0
    %220 = vmatpush1.msra.mxu0 0.0
    %221 = vmatprep.subr.mxu0 0.0
    %222 = vmatpush1.msra.mxu0 0.0
    %223 = vmatprep.subr.mxu0 0.0
    %224 = vmatpush1.msra.mxu0 0.0
    %225 = vmatprep.subr.mxu0 0.0
    %226 = vmatpush1.msra.mxu0 0.0
    %227 = vmatprep.subr.mxu0 0.0
    %228 = vmatpush1.msra.mxu0 0.0
    %229 = vmatprep.subr.mxu0 0.0
    %230 = vmatpush1.msra.mxu0 0.0
    %231 = vmatprep.subr.mxu0 0.0
    %232 = vmatpush1.msra.mxu0 0.0
    %233 = vmatprep.subr.mxu0 0.0
    %234 = vmatpush1.msra.mxu0 0.0
    %235 = vmatprep.subr.mxu0 0.0
    %236 = vmatpush1.msra.mxu0 0.0
    %237 = vmatprep.subr.mxu0 0.0
    %238 = vmatpush1.msra.mxu0 0.0
    %239 = vmatprep.subr.mxu0 0.0
    %240 = vmatpush1.msra.mxu0 0.0
    %241 = vmatprep.subr.mxu0 0.0
    %242 = vmatpush1.msra.mxu0 0.0
    %243 = vmatprep.mubr.f32.mxu0 0.0
    %244 = vmatmul.mubr.f32.gmra.mrb[0].mxu0 %v177
    %v245 = vpop.f32.mrb[0].mxu0
    %v246 = vadd.f32 %v174, %v245
    %v247 = vpop.f32.mrb[0].mxu0
    %248 = vdwg.mxu0
    %v249 = vmax.f32 %v246, 0.0
    %v250 = vand.u32 2147483647, %v246
    %v251 = vsub.f32 0.0, %v250
    %v252 = vmul.f32 %v251, 1.442695
    %v253 = vpow.pop %v252
    %v254 = vadd.f32 %v253, 1.0
    %v255 = vlog2.pop %v254
    %v256 = vmul.f32 %v255, 0.6931472
    %v257 = vmul.f32 -0.5, %v253
    %v258 = vadd.f32 %v257, 1.0
    %v259 = vmul.f32 %v258, %v253
    %v260 = vand.u32 2147483647, %v253
    %vm261 = vcmp.lt.f32.partialorder %v260, 0.0004427343
    %v262 = vsel %vm261, %v259, %v256
    %v263 = vadd.f32 %v249, %v262
    %v264 = vlaneseq
    %v265 = vand.u32 %v264, 127
    %vm266 = vcmp.ge.s32.totalorder %v265, 16
    %v267 = vsel %vm266, %v263, %v246
    %268 = vst [vmem:[#allocation10] sm:$0xff] %v267
    // Predicated region
    $region42: #{tpu_custom_call.1} parent=1 // pred_check
      _
    $region43: #{tpu_custom_call.1} parent=1 // pred_check_branch
      %270 = sbr.rel (0) target = $region45
    $region44: #{tpu_custom_call.1} parent=1 // pred_region
      %s272 = ssub.s32 128, 128
      %273 = vsyncadd [#allocation4], %s272
      %s275 = sshll.u32 [#allocation10], 4
      %s276 = int_to_ptr.vmem [resolvable:$true] %s275
      %278 = dma.vmem_to_hbm [thread:$0]  %s276, 128, %s6, [#allocation4]
    $region45: #{tpu_custom_call.1} parent=1 // pred_fallthru
      _
    // Predicated region
    $region46: #{tpu_custom_call.1} parent=1 // pred_check
      _
    $region47: #{tpu_custom_call.1} parent=1 // pred_check_branch
      %280 = sbr.rel (0) target = $region49
    $region48: #{tpu_custom_call.1} parent=1 // pred_region
      %281 = dma.done [#allocation4], 128
    $region49: #{tpu_custom_call.1} parent=1 // pred_fallthru
      _
    %282 = vsyncpa [#allocation3], 1
    %283 = vsyncpa [#allocation6], 1
    %284 = vsyncpa [#allocation9], 1
    %285 = vsyncpa [#allocation4], 1

</llo_original>
